<compile_context>
chip_gen: v7x
topology: tpu7x:2x2x1
jax: 0.10.0
libtpu: 0.0.40
codegen_flags: <defaults>
</compile_context>

<pallas_src>
import functools
import math

import jax
import jax.numpy as jnp
from jax.experimental import pallas as pl
from jax.experimental.pallas import tpu as pltpu


# ----------------------------------------------------------------------------
# Tiling helpers (per-generation caps: v7x has only 64 MiB VMEM per core)
# ----------------------------------------------------------------------------
def _tile_caps():
    vmem = 128 << 20
    try:
        vmem = pltpu.get_tpu_info().vmem_capacity_bytes
    except Exception:
        pass
    if vmem <= (64 << 20):                       # v7x-class part: shrink tiles
        return (256, 128, 64, 32, 16, 8), (512, 256, 128)
    return (512, 256, 128, 64, 32, 16, 8), (1024, 512, 256, 128)


_M_TILES, _N_TILES = _tile_caps()                # row tiles / output-lane tiles
_KV_TILES = (512, 256, 128)                      # flash-attention K/V tiles


def _pick_tile(dim, candidates):
    for c in candidates:
        if c <= dim and dim % c == 0:
            return c
    return dim                                   # full dimension is always legal


def _round_up(x, m):
    return ((x + m - 1) // m) * m


# ----------------------------------------------------------------------------
# Pallas kernels
# ----------------------------------------------------------------------------
def _linear_kernel(x_ref, w_ref, b_ref, o_ref, *, activation):
    # bf16 operands, f32 MXU accumulation
    y = jnp.dot(x_ref[...], w_ref[...], preferred_element_type=jnp.float32)
    y = y + b_ref[...].astype(jnp.float32)
    if activation == "relu":
        y = jnp.maximum(y, 0.0)
    o_ref[...] = y.astype(o_ref.dtype)


def linear_pallas(x2d, w_bf, b, activation=None, out_dtype=jnp.float32):
    """x2d: [M, K] (any float dtype), w_bf: [K, N] bf16 (pre-cast), b: [N] f32.

    Grid is (N//TN, M//TM): the row axis is innermost, so the weight block
    index (which only depends on the outer axis) stays constant across the
    inner loop and the weight tile is NOT re-DMA'd per row tile.
    """
    M, K = x2d.shape
    _, N = w_bf.shape

    Mp = _round_up(M, 8)
    if Mp != M:
        x2d = jnp.pad(x2d, ((0, Mp - M), (0, 0)))
    TM = _pick_tile(Mp, _M_TILES)
    TN = _pick_tile(N, _N_TILES)

    x_bf = x2d.astype(jnp.bfloat16)
    kernel = functools.partial(_linear_kernel, activation=activation)
    # TODO(synk): very large K would benefit from a K grid axis + f32 VMEM
    # accumulator; all K in this model fit one block.
    out = pl.pallas_call(
        kernel,
        out_shape=jax.ShapeDtypeStruct((Mp, N), out_dtype),
        grid=(N // TN, Mp // TM),                      # rows innermost
        in_specs=[
            pl.BlockSpec((TM, K), lambda j, i: (i, 0)),
            pl.BlockSpec((K, TN), lambda j, i: (0, j)),   # resident across i
            pl.BlockSpec((1, TN), lambda j, i: (0, j)),
        ],
        out_specs=pl.BlockSpec((TM, TN), lambda j, i: (i, j)),
        compiler_params=pltpu.CompilerParams(
            dimension_semantics=("parallel", "parallel")),
    )(x_bf, w_bf, b.reshape(1, N))
    return out[:M] if Mp != M else out


def _add_layernorm_kernel(x_ref, r_ref, g_ref, b_ref, o_ref, *, eps):
    # fused residual add + LayerNorm: bf16 I/O, all statistics in f32
    x = x_ref[...].astype(jnp.float32) + r_ref[...].astype(jnp.float32)
    mu = jnp.mean(x, axis=-1, keepdims=True)
    var = jnp.mean((x - mu) ** 2, axis=-1, keepdims=True)
    y = (x - mu) * jax.lax.rsqrt(var + eps) * g_ref[...] + b_ref[...]
    o_ref[...] = y.astype(o_ref.dtype)


def add_layernorm_pallas(x2d, r2d, gamma, beta, eps=1e-5,
                         out_dtype=jnp.bfloat16):
    """LayerNorm(x2d + r2d).  x2d/r2d: [M, D] bf16, gamma/beta: [D] f32."""
    M, D = x2d.shape
    Mp = _round_up(M, 8)
    if Mp != M:
        x2d = jnp.pad(x2d, ((0, Mp - M), (0, 0)))
        r2d = jnp.pad(r2d, ((0, Mp - M), (0, 0)))
    TM = _pick_tile(Mp, _M_TILES)
    kernel = functools.partial(_add_layernorm_kernel, eps=eps)
    out = pl.pallas_call(
        kernel,
        out_shape=jax.ShapeDtypeStruct((Mp, D), out_dtype),
        grid=(Mp // TM,),
        in_specs=[
            pl.BlockSpec((TM, D), lambda i: (i, 0)),
            pl.BlockSpec((TM, D), lambda i: (i, 0)),
            pl.BlockSpec((1, D), lambda i: (0, 0)),
            pl.BlockSpec((1, D), lambda i: (0, 0)),
        ],
        out_specs=pl.BlockSpec((TM, D), lambda i: (i, 0)),
        compiler_params=pltpu.CompilerParams(dimension_semantics=("parallel",)),
    )(x2d, r2d, gamma.reshape(1, D), beta.reshape(1, D))
    return out[:M] if Mp != M else out


def _make_flash_attn_kernel(scale):
    """Flash-style attention: grid = (B, H, q-tiles, kv-tiles)."""
    def kernel(q_ref, k_ref, v_ref, bias_ref, o_ref, m_sc, l_sc, acc_sc):
        ki = pl.program_id(3)

        @pl.when(ki == 0)
        def _():
            m_sc[...] = jnp.full(m_sc.shape, -jnp.inf, jnp.float32)
            l_sc[...] = jnp.zeros(l_sc.shape, jnp.float32)
            acc_sc[...] = jnp.zeros(acc_sc.shape, jnp.float32)

        q = q_ref[0, 0]                              # [TQ, Dh] bf16
        k = k_ref[0, 0]                              # [TK, Dh] bf16
        v = v_ref[0, 0]                              # [TK, Dh] bf16
        bias = bias_ref[0].astype(jnp.float32)       # [TQ, TK] additive 0 / -1e9

        s = jax.lax.dot_general(q, k, (((1,), (1,)), ((), ())),
                                preferred_element_type=jnp.float32)
        s = s * scale + bias
        m_prev = m_sc[...]
        m_new = jnp.maximum(m_prev, jnp.max(s, axis=-1, keepdims=True))
        alpha = jnp.exp(m_prev - m_new)
        p = jnp.exp(s - m_new)
        l_sc[...] = alpha * l_sc[...] + jnp.sum(p, axis=-1, keepdims=True)
        acc_sc[...] = alpha * acc_sc[...] + jnp.dot(
            p.astype(v.dtype), v, preferred_element_type=jnp.float32)
        m_sc[...] = m_new

        @pl.when(ki == pl.num_programs(3) - 1)
        def _():
            o_ref[0, 0] = (acc_sc[...] *
                           pl.reciprocal(l_sc[...], approx=True)
                           ).astype(o_ref.dtype)
    return kernel


def _make_attention_probs_kernel(scale):
    """Per-(batch, head) attention that also writes the probability map
    (exact softmax normalization — used for the single returned attn_map)."""
    def kernel(q_ref, k_ref, v_ref, bias_ref, ctx_ref, p_ref):
        q = q_ref[0, 0]
        k = k_ref[0, 0]
        v = v_ref[0, 0]
        bias = bias_ref[0].astype(jnp.float32)
        s = jax.lax.dot_general(q, k, (((1,), (1,)), ((), ())),
                                preferred_element_type=jnp.float32)
        s = s * scale + bias
        m = jnp.max(s, axis=-1, keepdims=True)
        e = jnp.exp(s - m)
        p = e / jnp.sum(e, axis=-1, keepdims=True)     # exact normalization
        p_ref[0, 0] = p
        ctx_ref[0, 0] = jnp.dot(p.astype(v.dtype), v,
                                preferred_element_type=jnp.float32
                                ).astype(ctx_ref.dtype)
    return kernel


def attention_pallas(q, k, v, bias, return_probs=False):
    """q: [B,H,Tq,Dh] bf16, k/v: [B,H,Tk,Dh] bf16, bias: [B,Tq,Tk] bf16.
    Returns (ctx [B,H,Tq,Dh] bf16, probs [B,H,Tq,Tk] f32 or None)."""
    B, H, Tq, Dh = q.shape
    Tk = k.shape[2]
    scale = 1.0 / math.sqrt(Dh)

    if return_probs:
        # Single consumed attn_map -> full [Tq,Tk] scores per (batch, head).
        kernel = _make_attention_probs_kernel(scale)
        ctx, probs = pl.pallas_call(
            kernel,
            out_shape=(jax.ShapeDtypeStruct((B, H, Tq, Dh), jnp.bfloat16),
                       jax.ShapeDtypeStruct((B, H, Tq, Tk), jnp.float32)),
            grid=(B, H),
            in_specs=[
                pl.BlockSpec((1, 1, Tq, Dh), lambda b, h: (b, h, 0, 0)),
                pl.BlockSpec((1, 1, Tk, Dh), lambda b, h: (b, h, 0, 0)),
                pl.BlockSpec((1, 1, Tk, Dh), lambda b, h: (b, h, 0, 0)),
                pl.BlockSpec((1, Tq, Tk), lambda b, h: (b, 0, 0)),
            ],
            out_specs=(pl.BlockSpec((1, 1, Tq, Dh), lambda b, h: (b, h, 0, 0)),
                       pl.BlockSpec((1, 1, Tq, Tk), lambda b, h: (b, h, 0, 0))),
            compiler_params=pltpu.CompilerParams(
                dimension_semantics=("parallel", "parallel")),
        )(q, k, v, bias)
        return ctx, probs

    TQ = _pick_tile(Tq, _M_TILES)
    TK = _pick_tile(Tk, _KV_TILES)
    kernel = _make_flash_attn_kernel(scale)
    ctx = pl.pallas_call(
        kernel,
        out_shape=jax.ShapeDtypeStruct((B, H, Tq, Dh), jnp.bfloat16),
        grid=(B, H, Tq // TQ, Tk // TK),
        in_specs=[
            pl.BlockSpec((1, 1, TQ, Dh), lambda b, h, qi, ki: (b, h, qi, 0)),
            pl.BlockSpec((1, 1, TK, Dh), lambda b, h, qi, ki: (b, h, ki, 0)),
            pl.BlockSpec((1, 1, TK, Dh), lambda b, h, qi, ki: (b, h, ki, 0)),
            pl.BlockSpec((1, TQ, TK), lambda b, h, qi, ki: (b, qi, ki)),
        ],
        out_specs=pl.BlockSpec((1, 1, TQ, Dh),
                               lambda b, h, qi, ki: (b, h, qi, 0)),
        scratch_shapes=[pltpu.VMEM((TQ, 1), jnp.float32),
                        pltpu.VMEM((TQ, 1), jnp.float32),
                        pltpu.VMEM((TQ, Dh), jnp.float32)],
        compiler_params=pltpu.CompilerParams(
            dimension_semantics=("parallel", "parallel", "parallel",
                                 "arbitrary")),
    )(q, k, v, bias)
    return ctx, None


# ----------------------------------------------------------------------------
# Model glue (plain JAX): embeddings, bias masks, residual wiring, reshapes
# ----------------------------------------------------------------------------
def sinusoidal_pe(seq_len, d):
    pos = jnp.arange(seq_len, dtype=jnp.float32)[:, None]
    i = jnp.arange(d // 2, dtype=jnp.float32)[None, :]
    angle = pos / jnp.power(10000.0, 2.0 * i / d)
    pe = jnp.zeros((seq_len, d), jnp.float32)
    pe = pe.at[:, 0::2].set(jnp.sin(angle))
    pe = pe.at[:, 1::2].set(jnp.cos(angle))
    return pe


def multi_head_attention(p, x_q, x_kv, bias, cfg, return_probs=False):
    B, Tq, D = x_q.shape
    Tk = x_kv.shape[1]
    H = cfg["n_heads"]
    Dh = D // H

    if "wqkv" in p:
        # fused Q/K/V projection: one GEMM, x read from HBM once
        qkv = linear_pallas(x_q.reshape(-1, D), p["wqkv"], p["bqkv"],
                            out_dtype=jnp.bfloat16).reshape(B, Tq, 3, H, Dh)
        q, k, v = qkv[:, :, 0], qkv[:, :, 1], qkv[:, :, 2]
    else:
        q = linear_pallas(x_q.reshape(-1, D), p["wq"], p["bq"],
                          out_dtype=jnp.bfloat16).reshape(B, Tq, H, Dh)
        kv = linear_pallas(x_kv.reshape(-1, D), p["wkv"], p["bkv"],
                           out_dtype=jnp.bfloat16).reshape(B, Tk, 2, H, Dh)
        k, v = kv[:, :, 0], kv[:, :, 1]

    q = q.transpose(0, 2, 1, 3)
    k = k.transpose(0, 2, 1, 3)
    v = v.transpose(0, 2, 1, 3)

    ctx, probs = attention_pallas(q, k, v, bias, return_probs=return_probs)

    ctx = ctx.transpose(0, 2, 1, 3).reshape(B, Tq, D)          # bf16
    out = linear_pallas(ctx.reshape(-1, D), p["wo"], p["bo"],
                        out_dtype=jnp.bfloat16).reshape(B, Tq, D)
    return out, probs


def feed_forward(p, x):
    B, T, D = x.shape
    h = linear_pallas(x.reshape(-1, D), p["w1"], p["b1"],
                      activation="relu", out_dtype=jnp.bfloat16)
    o = linear_pallas(h, p["w2"], p["b2"], out_dtype=jnp.bfloat16)
    return o.reshape(B, T, D)


def add_layer_norm(p, x, residual_add):
    B, T, D = x.shape
    return add_layernorm_pallas(x.reshape(-1, D), residual_add.reshape(-1, D),
                                p["g"], p["b"]).reshape(B, T, D)


def encoder_layer(lp, x, src_bias, cfg):
    attn_out, _ = multi_head_attention(lp["self_attn"], x, x, src_bias, cfg)
    x = add_layer_norm(lp["ln1"], x, attn_out)
    ffn_out = feed_forward(lp["ffn"], x)
    x = add_layer_norm(lp["ln2"], x, ffn_out)
    return x


def decoder_layer(lp, x, enc_out, self_bias, cross_bias, cfg, return_probs):
    self_out, _ = multi_head_attention(lp["self_attn"], x, x, self_bias, cfg)
    x = add_layer_norm(lp["ln1"], x, self_out)
    enc_attn_out, attn_map = multi_head_attention(
        lp["enc_attn"], x, enc_out, cross_bias, cfg, return_probs=return_probs)
    x = add_layer_norm(lp["ln2"], x, enc_attn_out)
    ffn_out = feed_forward(lp["ffn"], x)
    x = add_layer_norm(lp["ln3"], x, ffn_out)
    return x, attn_map


def encoder_forward(params, source, cfg):
    B, S = source.shape
    D = cfg["hidden"]
    scale = jnp.sqrt(jnp.float32(D))
    x = (params["enc_emb"][source] * scale + sinusoidal_pe(S, D)[None]
         ).astype(jnp.bfloat16)

    src_keep = (source != cfg["pad_idx"])[:, None, :]                 # [B,1,S]
    src_bias = jnp.where(jnp.broadcast_to(src_keep, (B, S, S)),
                         0.0, -1e9).astype(jnp.bfloat16)              # [B,S,S]

    for lp in params["enc_layers"]:
        x = encoder_layer(lp, x, src_bias, cfg)
    return x


def decoder_forward(params, target, source, enc_out, cfg):
    B, T = target.shape
    S = source.shape[1]
    D = cfg["hidden"]
    V = cfg["dec_vocab"]
    scale = jnp.sqrt(jnp.float32(D))
    x = (params["dec_emb"][target] * scale + sinusoidal_pe(T, D)[None]
         ).astype(jnp.bfloat16)

    src_keep = (source != cfg["pad_idx"])[:, None, :]                 # [B,1,S]
    cross_bias = jnp.where(jnp.broadcast_to(src_keep, (B, T, S)),
                           0.0, -1e9).astype(jnp.bfloat16)            # [B,T,S]
    trg_keep = (target != cfg["pad_idx"])[:, None, :]                 # [B,1,T]
    causal = jnp.tril(jnp.ones((T, T), bool))[None]                   # [1,T,T]
    self_bias = jnp.where(jnp.logical_and(trg_keep, causal),
                          0.0, -1e9).astype(jnp.bfloat16)             # [B,T,T]

    n_layers = len(params["dec_layers"])
    attn_map = None
    for li, lp in enumerate(params["dec_layers"]):
        want_probs = (li == n_layers - 1)   # only the consumed attn_map
        x, layer_map = decoder_layer(lp, x, enc_out, self_bias, cross_bias,
                                     cfg, want_probs)
        if want_probs:
            attn_map = layer_map

    # TODO(synk): classifier-head GEMM runs with bf16 operands; keep f32 weight
    # here if bit-faithful logits vs. the fp32 PyTorch reference are required.
    logits = linear_pallas(x.reshape(-1, D), params["out_proj"]["w"],
                           params["out_proj"]["b"],
                           out_dtype=jnp.float32).reshape(B, T, V)
    return logits, attn_map


def transformer_forward(params, source, target, cfg):
    enc_out = encoder_forward(params, source, cfg)
    output, attn_map = decoder_forward(params, target, source, enc_out, cfg)
    return output, attn_map


# ----------------------------------------------------------------------------
# Parameter initialization + one-time kernel-ready preparation
# ----------------------------------------------------------------------------
def _init_linear(key, din, dout):
    w = jax.random.normal(key, (din, dout), jnp.float32) * 0.02
    b = jnp.zeros((dout,), jnp.float32)
    return w, b


def _init_mha(key, d):
    ks = jax.random.split(key, 4)
    wq, bq = _init_linear(ks[0], d, d)
    wk, bk = _init_linear(ks[1], d, d)
    wv, bv = _init_linear(ks[2], d, d)
    wo, bo = _init_linear(ks[3], d, d)
    return dict(wq=wq, bq=bq, wk=wk, bk=bk, wv=wv, bv=bv, wo=wo, bo=bo)


def _init_ln(d):
    return dict(g=jnp.ones((d,), jnp.float32), b=jnp.zeros((d,), jnp.float32))


def _init_ffn(key, d, dff):
    k1, k2 = jax.random.split(key)
    w1, b1 = _init_linear(k1, d, dff)
    w2, b2 = _init_linear(k2, dff, d)
    return dict(w1=w1, b1=b1, w2=w2, b2=b2)


def init_params(key, cfg):
    D, Dff = cfg["hidden"], cfg["ffn"]
    keys = jax.random.split(key, 4 + 4 * cfg["n_layers"] + 6 * cfg["n_layers"])
    ki = iter(range(len(keys)))

    params = {
        "enc_emb": jax.random.normal(keys[next(ki)], (cfg["enc_vocab"], D),
                                     jnp.float32) * 0.02,
        "dec_emb": jax.random.normal(keys[next(ki)], (cfg["dec_vocab"], D),
                                     jnp.float32) * 0.02,
        "enc_layers": [],
        "dec_layers": [],
    }
    for _ in range(cfg["n_layers"]):
        params["enc_layers"].append(dict(
            self_attn=_init_mha(keys[next(ki)], D),
            ln1=_init_ln(D),
            ffn=_init_ffn(keys[next(ki)], D, Dff),
            ln2=_init_ln(D),
        ))
    for _ in range(cfg["n_layers"]):
        params["dec_layers"].append(dict(
            self_attn=_init_mha(keys[next(ki)], D),
            ln1=_init_ln(D),
            enc_attn=_init_mha(keys[next(ki)], D),
            ln2=_init_ln(D),
            ffn=_init_ffn(keys[next(ki)], D, Dff),
            ln3=_init_ln(D),
        ))
    w, b = _init_linear(keys[next(ki)], D, cfg["dec_vocab"])
    params["out_proj"] = dict(w=w, b=b)
    return params


def prepare_params(params):
    """One-time parameter preparation: bf16 weight casts and fused-projection
    concatenation happen HERE, not per forward call (no steady-state cast/concat
    HBM traffic)."""
    def bf(w):
        return w.astype(jnp.bfloat16)

    def prep_self_attn(p):
        return dict(
            wqkv=bf(jnp.concatenate([p["wq"], p["wk"], p["wv"]], axis=1)),
            bqkv=jnp.concatenate([p["bq"], p["bk"], p["bv"]]),
            wo=bf(p["wo"]), bo=p["bo"])

    def prep_cross_attn(p):
        return dict(
            wq=bf(p["wq"]), bq=p["bq"],
            wkv=bf(jnp.concatenate([p["wk"], p["wv"]], axis=1)),
            bkv=jnp.concatenate([p["bk"], p["bv"]]),
            wo=bf(p["wo"]), bo=p["bo"])

    def prep_ffn(p):
        return dict(w1=bf(p["w1"]), b1=p["b1"], w2=bf(p["w2"]), b2=p["b2"])

    fast = dict(
        enc_emb=params["enc_emb"],
        dec_emb=params["dec_emb"],
        enc_layers=[],
        dec_layers=[],
        out_proj=dict(w=bf(params["out_proj"]["w"]), b=params["out_proj"]["b"]),
    )
    for lp in params["enc_layers"]:
        fast["enc_layers"].append(dict(
            self_attn=prep_self_attn(lp["self_attn"]),
            ln1=lp["ln1"],
            ffn=prep_ffn(lp["ffn"]),
            ln2=lp["ln2"],
        ))
    for lp in params["dec_layers"]:
        fast["dec_layers"].append(dict(
            self_attn=prep_self_attn(lp["self_attn"]),
            ln1=lp["ln1"],
            enc_attn=prep_cross_attn(lp["enc_attn"]),
            ln2=lp["ln2"],
            ffn=prep_ffn(lp["ffn"]),
            ln3=lp["ln3"],
        ))
    return fast


# ----------------------------------------------------------------------------
if __name__ == "__main__":
    cfg = dict(
        enc_vocab=50, dec_vocab=50,
        hidden=32, n_heads=4, ffn=64, n_layers=2,
        pad_idx=0,
    )
    B, S, T = 2, 8, 8

    root = jax.random.PRNGKey(0)
    kp, ks, kt = jax.random.split(root, 3)
    raw_params = init_params(kp, cfg)
    params = prepare_params(raw_params)          # bf16 casts + fused concats, once

    source = jax.random.randint(ks, (B, S), 1, cfg["enc_vocab"], dtype=jnp.int32)
    target = jax.random.randint(kt, (B, T), 1, cfg["dec_vocab"], dtype=jnp.int32)
    # add a couple of pad tokens so the masks actually do something
    source = source.at[0, -2:].set(cfg["pad_idx"])
    target = target.at[1, -1:].set(cfg["pad_idx"])

    output, attn_map = transformer_forward(params, source, target, cfg)
    jax.block_until_ready((output, attn_map))

    assert output.shape == (B, T, cfg["dec_vocab"])
    assert attn_map.shape == (B, cfg["n_heads"], T, S)
    assert bool(jnp.all(jnp.isfinite(output)))
    # returned attention map uses exact softmax normalization -> rows sum to 1
    assert bool(jnp.allclose(jnp.sum(attn_map, axis=-1), 1.0, atol=1e-3))

    # TODO(synk): dropout layers from the PyTorch module are omitted (eval-mode semantics).
    print("KERNEL_OK")
</pallas_src>

<mosaic_0001>
module attributes {stable_mosaic.version = 11 : i64} {
  func.func @_linear_kernel(%arg0: i32, %arg1: i32, %arg2: memref<16x32xbf16, #tpu.memory_space<vmem>>, %arg3: memref<32x96xbf16, #tpu.memory_space<vmem>>, %arg4: memref<1x96xf32, #tpu.memory_space<vmem>>, %arg5: memref<16x96xbf16, #tpu.memory_space<vmem>>) attributes {dimension_semantics = [#tpu.dimension_semantics<parallel>, #tpu.dimension_semantics<parallel>], iteration_bounds = array<i64: 1, 1>, scalar_prefetch = 0 : i64, scratch_operands = 0 : i64, tpu.core_type = #tpu.core_type<tc>, window_params = [{transform_indices = @transform_0, window_bounds = array<i64: 16, 32>}, {transform_indices = @transform_1, window_bounds = array<i64: 32, 96>}, {transform_indices = @transform_2, window_bounds = array<i64: 1, 96>}, {transform_indices = @transform_3, window_bounds = array<i64: 16, 96>}]} {
    %c0 = arith.constant 0 : index
    %c0_0 = arith.constant 0 : index
    %0 = vector.load %arg2[%c0, %c0_0] : memref<16x32xbf16, #tpu.memory_space<vmem>>, vector<16x32xbf16>
    %c0_1 = arith.constant 0 : index
    %c0_2 = arith.constant 0 : index
    %1 = vector.load %arg3[%c0_1, %c0_2] : memref<32x96xbf16, #tpu.memory_space<vmem>>, vector<32x96xbf16>
    %cst = arith.constant dense<0.000000e+00> : vector<16x96xf32>
    %2 = tpu.matmul %0, %1, %cst {dimension_numbers = #tpu.dot_dimension_numbers<[1], [0], [0], [1], [0, 0, 1, 1], [], []>} : vector<16x32xbf16>, vector<32x96xbf16>, vector<16x96xf32> -> vector<16x96xf32>
    %c0_3 = arith.constant 0 : index
    %c0_4 = arith.constant 0 : index
    %3 = vector.load %arg4[%c0_3, %c0_4] : memref<1x96xf32, #tpu.memory_space<vmem>>, vector<1x96xf32>
    %4 = vector.broadcast %3 : vector<1x96xf32> to vector<16x96xf32>
    %5 = arith.addf %2, %4 : vector<16x96xf32>
    %6 = arith.truncf %5 : vector<16x96xf32> to vector<16x96xbf16>
    %c0_5 = arith.constant 0 : index
    %c0_6 = arith.constant 0 : index
    %7 = vector.load %arg5[%c0_5, %c0_6] : memref<16x96xbf16, #tpu.memory_space<vmem>>, vector<16x96xbf16>
    tpu.vector_store %arg5[%c0_5, %c0_6], %6 {strides = array<i32>} : memref<16x96xbf16, #tpu.memory_space<vmem>>, vector<16x96xbf16>,
    return
  }
  func.func @transform_0(%arg0: i32, %arg1: i32) -> (i32, i32) {
    %c0_i32 = arith.constant 0 : i32
    %c0_i32_0 = arith.constant 0 : i32
    return %arg1, %c0_i32 : i32, i32
  }
  func.func @transform_1(%arg0: i32, %arg1: i32) -> (i32, i32) {
    %c0_i32 = arith.constant 0 : i32
    %c0_i32_0 = arith.constant 0 : i32
    return %c0_i32, %arg0 : i32, i32
  }
  func.func @transform_2(%arg0: i32, %arg1: i32) -> (i32, i32) {
    %c0_i32 = arith.constant 0 : i32
    %c0_i32_0 = arith.constant 0 : i32
    return %c0_i32, %arg0 : i32, i32
  }
  func.func @transform_3(%arg0: i32, %arg1: i32) -> (i32, i32) {
    %c0_i32 = arith.constant 0 : i32
    return %arg1, %arg0 : i32, i32
  }
}

</mosaic_0001>

<llo_original>
// kernel: tpu_custom_call.1
$region0: #{tpu_custom_call.1}
  #allocation0 [shape = 'u32[]', space=smem, size = 0x4, offset = 0x4, fixed_abs, tag = 'smem constant byte address 0x4 - core index']
  #allocation1 [shape = 'u32[144,128]{1,0:T(1,128)}', space=vmem, size = 0x12000, scoped, tag = 'internal scratch']
  %s0 = inlined_call_operand.hbm [shape: bf16[16,32], index: 0, kind: input, shape index: {}]
  %s1 = inlined_call_operand.hbm [shape: bf16[32,96], index: 1, kind: input, shape index: {}]
  %s2 = inlined_call_operand.vmem [shape: f32[1,96], index: 2, kind: input, shape index: {}]
  %s3 = inlined_call_operand.hbm [shape: bf16[16,96], index: 3, kind: output, shape index: {}]
  %s4 = sld [smem:[#allocation0]]
  $region30: #{tpu_custom_call.1} parent=0
    _
  %s6 = ssub.s32 1, %s4
  %s7 = scalar_select 0, %s6, %s4
  $region1: #{tpu_custom_call.1} parent=0
    #allocation2 [shape = 'u8[4096]{0}', space=vmem, size = 0x1000, scoped, tag = 'input window, operand 0, single buffered']
    #allocation3 [shape = 's32[1]{0}', space=sflag, size = 0x4, scoped, tag = 'scoped memory for tpu_custom_call.1']
    #allocation4 [shape = 's32[1]{0}', space=sflag, size = 0x4, scoped, tag = 'scoped memory for tpu_custom_call.1']
    #allocation5 [shape = 'u8[8192]{0}', space=vmem, size = 0x2000, scoped, tag = 'input window, operand 1, single buffered']
    #allocation6 [shape = 's32[1]{0}', space=sflag, size = 0x4, scoped, tag = 'scoped memory for tpu_custom_call.1']
    #allocation7 [shape = 'u8[4096]{0}', space=vmem, size = 0x1000, scoped, tag = 'output window, operand 0, single buffered']
    %8 = vsyncpa [#allocation3], 0
    %9 = vsyncpa [#allocation6], 0
    %10 = vsyncpa [#allocation4], 0
    // Predicated region
    $region2: #{tpu_custom_call.1} parent=1 // pred_check
      _
    $region3: #{tpu_custom_call.1} parent=1 // pred_check_branch
      %12 = sbr.rel (0) target = $region5
    $region4: #{tpu_custom_call.1} parent=1 // pred_region
      %s14 = ssub.s32 128, 128
      %15 = vsyncadd [#allocation3], %s14
      %s16 = sshll.u32 [#allocation2], 4
      %s17 = int_to_ptr.vmem [resolvable:$true] %s16
      %22 = dma.hbm_to_vmem [thread:$0]  %s0, 128, %s17, [#allocation3], 64, 64, 4
    $region5: #{tpu_custom_call.1} parent=1 // pred_fallthru
      _
    // Predicated region
    $region6: #{tpu_custom_call.1} parent=1 // pred_check
      _
    $region7: #{tpu_custom_call.1} parent=1 // pred_check_branch
      %24 = sbr.rel (0) target = $region9
    $region8: #{tpu_custom_call.1} parent=1 // pred_region
      %s26 = ssub.s32 256, 256
      %27 = vsyncadd [#allocation6], %s26
      %s28 = sshll.u32 [#allocation5], 4
      %s29 = int_to_ptr.vmem [resolvable:$true] %s28
      %34 = dma.hbm_to_vmem [thread:$0]  %s1, 256, %s29, [#allocation6], 64, 64, 4
    $region9: #{tpu_custom_call.1} parent=1 // pred_fallthru
      _
    // Predicated region
    $region10: #{tpu_custom_call.1} parent=1 // pred_check
      _
    $region11: #{tpu_custom_call.1} parent=1 // pred_check_branch
      %36 = sbr.rel (0) target = $region13
    $region12: #{tpu_custom_call.1} parent=1 // pred_region
      _
    $region13: #{tpu_custom_call.1} parent=1 // pred_fallthru
      _
    // Predicated region
    $region14: #{tpu_custom_call.1} parent=1 // pred_check
      _
    $region15: #{tpu_custom_call.1} parent=1 // pred_check_branch
      %38 = sbr.rel (0) target = $region17
    $region16: #{tpu_custom_call.1} parent=1 // pred_region
      %39 = dma.done [#allocation3], 128
    $region17: #{tpu_custom_call.1} parent=1 // pred_fallthru
      _
    // Predicated region
    $region18: #{tpu_custom_call.1} parent=1 // pred_check
      _
    $region19: #{tpu_custom_call.1} parent=1 // pred_check_branch
      %41 = sbr.rel (0) target = $region21
    $region20: #{tpu_custom_call.1} parent=1 // pred_region
      %42 = dma.done [#allocation6], 256
    $region21: #{tpu_custom_call.1} parent=1 // pred_fallthru
      _
    %v44 = vld [vmem:[#allocation2] sm:$0xf]
    %v45 = vld [vmem:[#allocation2 + $0x4] sm:$0xf]
    %v46 = vld [vmem:[#allocation5] sm:$0xf]
    %v47 = vld [vmem:[#allocation5 + $0x4] sm:$0xf]
    %v48 = vld [vmem:[#allocation5 + $0x8] sm:$0xf]
    %v49 = vld [vmem:[#allocation5 + $0xc] sm:$0xf]
    %v50 = vld [vmem:[%s2] sm:$0x1]
    %v52 = vlaneseq
    %v53 = vshrl.u32 %v52, 7
    %v54 = vsub.s32 0, %v53
    %v55 = vrot.slane %v50, %v54
    %v59 = vunpack.c.l.b16 %v44
    %v60 = vunpack.c.l.b16 %v45
    %v61 = vpack.c.b16 %v60, %v59
    %v66 = vunpack.c.l.b16 %v46
    %v67 = vunpack.c.l.b16 %v47
    %v68 = vunpack.c.l.b16 %v48
    %v69 = vunpack.c.l.b16 %v49
    %v70 = vpack.c.b16 %v67, %v66
    %v71 = vpack.c.b16 %v69, %v68
    %vm74 = vcmask 261120
    %v76 = vsel %vm74, %v61, 0
    %78 = vmatprep.subr.bf16.mxu0 0
    %79 = vmatpush1.bf16.msra.mxu0 %v70
    %80 = vmatprep.subr.bf16.mxu0 0
    %81 = vmatpush1.bf16.msra.mxu0 %v71
    %82 = vmatprep.subr.bf16.mxu0 0
    %83 = vmatpush1.bf16.msra.mxu0 0
    %84 = vmatprep.subr.bf16.mxu0 0
    %85 = vmatpush1.bf16.msra.mxu0 0
    %86 = vmatprep.subr.bf16.mxu0 0
    %87 = vmatpush1.bf16.msra.mxu0 0
    %88 = vmatprep.subr.bf16.mxu0 0
    %89 = vmatpush1.bf16.msra.mxu0 0
    %90 = vmatprep.subr.bf16.mxu0 0
    %91 = vmatpush1.bf16.msra.mxu0 0
    %92 = vmatprep.subr.bf16.mxu0 0
    %93 = vmatpush1.bf16.msra.mxu0 0
    %94 = vmatprep.subr.bf16.mxu0 0
    %95 = vmatpush1.bf16.msra.mxu0 0
    %96 = vmatprep.subr.bf16.mxu0 0
    %97 = vmatpush1.bf16.msra.mxu0 0
    %98 = vmatprep.subr.bf16.mxu0 0
    %99 = vmatpush1.bf16.msra.mxu0 0
    %100 = vmatprep.subr.bf16.mxu0 0
    %101 = vmatpush1.bf16.msra.mxu0 0
    %102 = vmatprep.subr.bf16.mxu0 0
    %103 = vmatpush1.bf16.msra.mxu0 0
    %104 = vmatprep.subr.bf16.mxu0 0
    %105 = vmatpush1.bf16.msra.mxu0 0
    %106 = vmatprep.subr.bf16.mxu0 0
    %107 = vmatpush1.bf16.msra.mxu0 0
    %108 = vmatprep.subr.bf16.mxu0 0
    %109 = vmatpush1.bf16.msra.mxu0 0
    %110 = vmatprep.mubr.bf16.mxu0 0
    %111 = vmatmul.mubr.bf16.gmra.mrb[0].mxu0 %v76
    %v112 = vpop.f32.mrb[0].mxu0
    %v113 = vadd.f32 %v55, %v112
    %v114 = vpop.f32.mrb[0].mxu0
    %v115 = vpop.f32.mrb[0].mxu0
    %v116 = vadd.f32 %v55, %v115
    %v117 = vpop.f32.mrb[0].mxu0
    %118 = vdwg.mxu0
    %v119 = vpack.c.bf16 %v116, %v113
    %v121 = vunpack.c.l.b16 %v119
    %v122 = vunpack.c.h.b16 %v119
    %v123 = vpack.c.b16 %v121, %v121
    %v124 = vpack.c.b16 %v122, %v122
    %vm127 = vcmask 781312
    %128 = vst.msk [vmem:[#allocation7] sm:$0xf] %vm127, %v123
    %129 = vst.msk [vmem:[#allocation7 + $0x4] sm:$0xf] %vm127, %v124
    // Predicated region
    $region22: #{tpu_custom_call.1} parent=1 // pred_check
      _
    $region23: #{tpu_custom_call.1} parent=1 // pred_check_branch
      %131 = sbr.rel (0) target = $region25
    $region24: #{tpu_custom_call.1} parent=1 // pred_region
      %s133 = ssub.s32 128, 128
      %134 = vsyncadd [#allocation4], %s133
      %s135 = sshll.u32 [#allocation7], 4
      %s136 = int_to_ptr.vmem [resolvable:$true] %s135
      %141 = dma.vmem_to_hbm [thread:$0]  %s136, 128, %s3, [#allocation4], 64, 64, 4
    $region25: #{tpu_custom_call.1} parent=1 // pred_fallthru
      _
    // Predicated region
    $region26: #{tpu_custom_call.1} parent=1 // pred_check
      _
    $region27: #{tpu_custom_call.1} parent=1 // pred_check_branch
      %143 = sbr.rel (0) target = $region29
    $region28: #{tpu_custom_call.1} parent=1 // pred_region
      %144 = dma.done [#allocation4], 128
    $region29: #{tpu_custom_call.1} parent=1 // pred_fallthru
      _
    %145 = vsyncpa [#allocation3], 1
    %146 = vsyncpa [#allocation6], 1
    %147 = vsyncpa [#allocation4], 1

</llo_original>
